<compile_context>
chip_gen: v6e
topology: v6e:2x2x1
jax: 0.10.0
libtpu: 0.0.40
codegen_flags: <defaults>
</compile_context>

<pallas_src>
import functools

import jax
import jax.numpy as jnp
from jax import lax
from jax.experimental import pallas as pl
from jax.experimental.pallas import tpu as pltpu

TOP_K = 5   # module default
K_PAD = 8   # sublane-padded row count for the gather matmul / scalar row


def _pick_hw_tile(hw, target=1024):
    """Largest multiple of 128 <= target that divides hw; else whole image."""
    if hw <= target:
        return hw
    cand = (target // 128) * 128
    while cand >= 128:
        if hw % cand == 0:
            return cand
        cand -= 128
    # TODO(synk): for spatial sizes with no 128-multiple divisor, pad HW to a
    # multiple of 128 instead of falling back to whole-image blocks.
    return hw


def _sort_desc(vals):
    """Bubble compare-exchange network (descending) on equally shaped arrays."""
    v = list(vals)
    n = len(v)
    for plen in range(n - 1, 0, -1):
        for i in range(plen):
            hi = jnp.maximum(v[i], v[i + 1])
            lo = jnp.minimum(v[i], v[i + 1])
            v[i], v[i + 1] = hi, lo
    return v


def _pool_kernel(logits_ref, psum_ref):
    # logits_ref: (1, C, hw_tile)   psum_ref: (1, 1, C, 1)
    x = logits_ref[0].astype(jnp.float32)                   # (C, hw)
    mx = jnp.max(x, axis=0, keepdims=True)                  # (1, hw) sublane reduce
    ex = jnp.exp(x - mx)
    inv_den = 1.0 / jnp.sum(ex, axis=0, keepdims=True)      # one recip per pixel
    sm = ex * inv_den                                       # (C, hw)
    psum_ref[0, 0] = jnp.sum(sm, axis=1, keepdims=True)     # (C, 1) per-tile sum


def _correct_kernel(logits_ref, cols_ref, sel_ref, scal_ref,
                    corrected_ref, emd_ref, *, top_k):
    x = logits_ref[0].astype(jnp.float32)                   # (C, hw)
    cols = cols_ref[0]                                      # (C, 2): [:,0]=mask [:,1]=sm_dist
    mask = cols[:, 0:1]                                     # (C, 1)
    dist = cols[:, 1:2]                                     # (C, 1)
    sel = sel_ref[0]                                        # (K_PAD, C) one-hot*mask rows
    scal = scal_ref[0]                                      # (1, K_PAD): cdf_true[0..k-1], valid

    # ---- per-pixel softmax over class (sublane) axis, reciprocal-multiply form
    mx = jnp.max(x, axis=0, keepdims=True)
    ex = jnp.exp(x - mx)
    inv_den = 1.0 / jnp.sum(ex, axis=0, keepdims=True)      # (1, hw)
    sm = ex * inv_den                                       # (C, hw)

    # ---- gather the image-level top-k class rows per pixel: one MXU matmul
    g = jnp.dot(sel, sm, preferred_element_type=jnp.float32)  # (K_PAD, hw)

    # d = sm*mask / sum(sm*mask); the row sum equals the sum of gathered values
    # (padded / tie-dropped rows of `sel` are zero).  No epsilon: matches reference.
    row_sum = jnp.sum(g, axis=0, keepdims=True)              # (1, hw)
    inv_rs = 1.0 / row_sum

    # corrected = softmax + (d - softmax_distribution) * mask   (written in NCHW layout)
    corrected = sm + mask * (sm * inv_rs - dist)
    corrected_ref[0] = corrected.astype(corrected_ref.dtype)

    # ---- EMD: per-pixel top-k of d == gathered values sorted desc, scaled by inv_rs.
    # Sorting commutes with the positive scale, so sort raw g rows and fold
    # inv_rs*valid into a single per-pixel scale.
    gsort = _sort_desc([g[i:i + 1, :] for i in range(top_k)])  # k x (1, hw), lane-dense
    valid = scal[:, top_k:top_k + 1]                           # (1, 1)
    scale = inv_rs * valid                                     # (1, hw)
    run = gsort[0]
    diff = run * scale - scal[:, 0:1]
    acc = diff * diff
    for i in range(1, top_k):
        run = run + gsort[i]
        diff = run * scale - scal[:, i:i + 1]
        acc = acc + diff * diff                                # (1, hw)
    emd_ref[0, 0] = jnp.sum(acc, axis=1, keepdims=True)        # (1, 1) per-tile partial


def distribution_match(pre_cls, logits, label, weight, bias,
                       top_k=TOP_K, hw_tile_target=1024):
    """pre_cls (N,512,H,W), logits (N,C,H,W), label (N,C,1,1), weight (C,512,1,1),
    bias (C,).  Returns (corrected (N,C,H,W) f32, EMD loss scalar).

    pre_cls/weight/bias only feed the `logits * sigmoid(conv(pool(pre_cls)))`
    branch whose result is never used by the reference forward -> dropped.
    """
    del pre_cls, weight, bias  # dead branch in the reference forward
    assert top_k <= K_PAD
    N, C, H, W = logits.shape
    HW = H * W
    hw_tile = _pick_hw_tile(HW, hw_tile_target)
    T = HW // hw_tile

    lgt = logits.reshape(N, C, HW)   # free reshape: C on sublanes, HW on lanes

    cparams = pltpu.CompilerParams(
        dimension_semantics=("parallel", "parallel"),
        vmem_limit_bytes=32 * 1024 * 1024)

    # -------- pass 1: per-tile class sums of the per-pixel softmax ----------------
    psum = pl.pallas_call(
        _pool_kernel,
        out_shape=jax.ShapeDtypeStruct((N, T, C, 1), jnp.float32),
        grid=(N, T),
        in_specs=[pl.BlockSpec((1, C, hw_tile), lambda n, t: (n, 0, t))],
        out_specs=pl.BlockSpec((1, 1, C, 1), lambda n, t: (n, t, 0, 0)),
        compiler_params=cparams,
    )(lgt)

    # -------- tiny per-image (N, C) work in plain JAX ------------------------------
    sm_dist = jnp.sum(psum[..., 0], axis=1) / HW               # (N, C) pooled distribution
    topk_vals, topk_idx = lax.top_k(sm_dist, top_k)
    thr = topk_vals[:, top_k - 1:top_k]                        # k-th largest
    mask = (sm_dist > thr).astype(jnp.float32)                 # strict '>' (torch semantics)
    sel = jax.nn.one_hot(topk_idx, C, dtype=jnp.float32) * mask[:, None, :]
    sel = jnp.pad(sel, ((0, 0), (0, K_PAD - top_k), (0, 0)))   # (N, K_PAD, C)
    cols = jnp.stack([mask, sm_dist], axis=-1)                 # (N, C, 2)

    lab = label.reshape(N, C).astype(jnp.float32) * mask
    lab = lab / (jnp.sum(lab, axis=1, keepdims=True) + 1e-12)
    k_label = lax.top_k(lab, top_k)[0]                         # (N, k) sorted desc
    cdf_true = jnp.cumsum(k_label, axis=1)                     # (N, k)
    valid = jnp.sum(k_label, axis=1, keepdims=True)            # (N, 1)
    scal = jnp.concatenate(
        [cdf_true, valid, jnp.zeros((N, K_PAD - top_k - 1), jnp.float32)],
        axis=1).reshape(N, 1, K_PAD)                           # (N, 1, K_PAD)

    # -------- pass 2: corrected (NCHW layout) + per-tile EMD partials --------------
    corrected, emd = pl.pallas_call(
        functools.partial(_correct_kernel, top_k=top_k),
        out_shape=(
            jax.ShapeDtypeStruct((N, C, HW), jnp.float32),
            jax.ShapeDtypeStruct((N, T, 1, 1), jnp.float32),
        ),
        grid=(N, T),
        in_specs=[
            pl.BlockSpec((1, C, hw_tile), lambda n, t: (n, 0, t)),
            pl.BlockSpec((1, C, 2), lambda n, t: (n, 0, 0)),
            pl.BlockSpec((1, K_PAD, C), lambda n, t: (n, 0, 0)),
            pl.BlockSpec((1, 1, K_PAD), lambda n, t: (n, 0, 0)),
        ],
        out_specs=(
            pl.BlockSpec((1, C, hw_tile), lambda n, t: (n, 0, t)),
            pl.BlockSpec((1, 1, 1, 1), lambda n, t: (n, t, 0, 0)),
        ),
        compiler_params=cparams,
    )(lgt, cols, sel, scal)

    corrected_nchw = corrected.reshape(N, C, H, W)             # free reshape, no transpose
    loss = jnp.sum(emd) / (N * top_k * HW)                     # torch.mean over (N,k,H,W)
    return corrected_nchw, loss


def reference_forward(pre_cls, logits, label, weight, bias, top_k=TOP_K):
    """Pure-JAX reference mirroring the PyTorch forward (distribution=None branch)."""
    sm = jax.nn.softmax(logits, axis=1)
    sm_dist = jnp.mean(sm, axis=(2, 3), keepdims=True)
    topk_vals = lax.top_k(sm_dist[:, :, 0, 0], top_k)[0]
    thr = jnp.min(topk_vals, axis=1)[:, None, None, None]
    mask = (sm_dist > thr).astype(jnp.float32)

    pooled = jnp.mean(pre_cls, axis=(2, 3))                          # (N, 512)
    x = jax.nn.sigmoid(pooled @ weight.reshape(weight.shape[0], -1).T + bias)
    _ = logits * x[:, :, None, None]                                 # dead code in reference

    d = jax.nn.softmax(logits, axis=1) * mask
    d = d / jnp.sum(d, axis=1, keepdims=True)
    k_dist = lax.top_k(jnp.transpose(d, (0, 2, 3, 1)), top_k)[0]
    k_dist = jnp.transpose(k_dist, (0, 3, 1, 2))                     # (N,k,H,W)

    lab = label * mask
    lab = lab / (jnp.sum(lab, axis=1, keepdims=True) + 1e-12)
    k_lab = lax.top_k(lab[:, :, 0, 0], top_k)[0][:, :, None, None]   # (N,k,1,1)

    cdf_p = jnp.cumsum(k_dist, axis=1)
    cdf_t = jnp.cumsum(k_lab, axis=1)
    valid = jnp.sum(k_lab, axis=1, keepdims=True)
    loss = jnp.mean(jnp.square(cdf_p * valid - cdf_t))

    corrected = sm + (d - sm_dist) * mask
    return corrected, loss


if __name__ == "__main__":
    N, Cin, C, H, W = 2, 512, 150, 8, 8
    key = jax.random.PRNGKey(0)
    k1, k2, k3, k4, k5 = jax.random.split(key, 5)
    pre_cls = jax.random.normal(k1, (N, Cin, H, W), jnp.float32)
    logits = jax.random.normal(k2, (N, C, H, W), jnp.float32)
    label = jax.nn.softmax(jax.random.normal(k3, (N, C), jnp.float32), axis=1)
    label = label.reshape(N, C, 1, 1)
    # Conv2d(512, 150, 1) parameters: only used by the dead branch / the reference.
    weight = jax.random.normal(k4, (C, Cin, 1, 1), jnp.float32) * 0.02
    bias = jax.random.normal(k5, (C,), jnp.float32) * 0.02

    corrected, loss = distribution_match(pre_cls, logits, label, weight, bias)
    corrected = jax.block_until_ready(corrected)
    loss = jax.block_until_ready(loss)

    ref_corrected, ref_loss = reference_forward(pre_cls, logits, label, weight, bias)
    assert corrected.shape == (N, C, H, W)
    assert jnp.allclose(corrected, ref_corrected, atol=1e-5, rtol=1e-5), (
        float(jnp.max(jnp.abs(corrected - ref_corrected))))
    assert jnp.allclose(loss, ref_loss, atol=1e-6, rtol=1e-4), (float(loss), float(ref_loss))
    print("KERNEL_OK")
</pallas_src>

<mosaic_0001>
module attributes {stable_mosaic.version = 11 : i64} {
  func.func @_pool_kernel(%arg0: i32, %arg1: i32, %arg2: memref<1x150x64xf32, #tpu.memory_space<vmem>>, %arg3: memref<1x1x150x1xf32, #tpu.memory_space<vmem>>) attributes {dimension_semantics = [#tpu.dimension_semantics<parallel>, #tpu.dimension_semantics<parallel>], iteration_bounds = array<i64: 2, 1>, scalar_prefetch = 0 : i64, scratch_operands = 0 : i64, tpu.core_type = #tpu.core_type<tc>, window_params = [{transform_indices = @transform_0, window_bounds = array<i64: 1, 150, 64>}, {transform_indices = @transform_1, window_bounds = array<i64: 1, 1, 150, 1>}]} {
    %c0 = arith.constant 0 : index
    %c0_0 = arith.constant 0 : index
    %c0_1 = arith.constant 0 : index
    %0 = vector.load %arg2[%c0, %c0_0, %c0_1] : memref<1x150x64xf32, #tpu.memory_space<vmem>>, vector<1x150x64xf32>
    %1 = vector.shape_cast %0 : vector<1x150x64xf32> to vector<150x64xf32>
    %cst = arith.constant dense<0xFF800000> : vector<64xf32>
    %2 = vector.multi_reduction <maximumf>, %1, %cst [0] : vector<150x64xf32> to vector<64xf32>
    %3 = vector.shape_cast %2 : vector<64xf32> to vector<1x64xf32>
    %4 = vector.broadcast %3 : vector<1x64xf32> to vector<150x64xf32>
    %5 = arith.subf %1, %4 : vector<150x64xf32>
    %6 = math.exp %5 : vector<150x64xf32>
    %cst_2 = arith.constant dense<0.000000e+00> : vector<64xf32>
    %7 = vector.multi_reduction <add>, %6, %cst_2 [0] : vector<150x64xf32> to vector<64xf32>
    %8 = vector.shape_cast %7 : vector<64xf32> to vector<1x64xf32>
    %cst_3 = arith.constant 1.000000e+00 : f32
    %9 = vector.broadcast %cst_3 : f32 to vector<1x64xf32>
    %10 = arith.divf %9, %8 : vector<1x64xf32>
    %11 = vector.broadcast %10 : vector<1x64xf32> to vector<150x64xf32>
    %12 = arith.mulf %6, %11 : vector<150x64xf32>
    %cst_4 = arith.constant dense<0.000000e+00> : vector<150xf32>
    %13 = vector.multi_reduction <add>, %12, %cst_4 [1] : vector<150x64xf32> to vector<150xf32>
    %14 = vector.shape_cast %13 : vector<150xf32> to vector<150x1xf32>
    %c0_5 = arith.constant 0 : index
    %c0_6 = arith.constant 0 : index
    %c0_7 = arith.constant 0 : index
    %c0_8 = arith.constant 0 : index
    %15 = vector.load %arg3[%c0_5, %c0_6, %c0_7, %c0_8] : memref<1x1x150x1xf32, #tpu.memory_space<vmem>>, vector<1x1x150x1xf32>
    %16 = vector.shape_cast %15 : vector<1x1x150x1xf32> to vector<150x1xf32>
    %17 = vector.shape_cast %14 : vector<150x1xf32> to vector<1x1x150x1xf32>
    tpu.vector_store %arg3[%c0_5, %c0_6, %c0_7, %c0_8], %17 {strides = array<i32>} : memref<1x1x150x1xf32, #tpu.memory_space<vmem>>, vector<1x1x150x1xf32>,
    return
  }
  func.func @transform_0(%arg0: i32, %arg1: i32) -> (i32, i32, i32) {
    %c0_i32 = arith.constant 0 : i32
    %c0_i32_0 = arith.constant 0 : i32
    return %arg0, %c0_i32, %arg1 : i32, i32, i32
  }
  func.func @transform_1(%arg0: i32, %arg1: i32) -> (i32, i32, i32, i32) {
    %c0_i32 = arith.constant 0 : i32
    %c0_i32_0 = arith.constant 0 : i32
    %c0_i32_1 = arith.constant 0 : i32
    return %arg0, %arg1, %c0_i32, %c0_i32_0 : i32, i32, i32, i32
  }
}

</mosaic_0001>

<llo_original>
// kernel: tpu_custom_call.1
$region0: #{tpu_custom_call.1}
  #allocation0 [shape = 'u32[]', space=smem, size = 0x4, offset = 0x4, fixed_abs, tag = 'smem constant byte address 0x4 - core index']
  #allocation1 [shape = 'u32[144,128]{1,0:T(1,128)}', space=vmem, size = 0x12000, scoped, tag = 'internal scratch']
  %s0 = inlined_call_operand.vmem [shape: f32[2,150,64], index: 0, kind: input, shape index: {}]
  %s1 = inlined_call_operand.vmem [shape: f32[2,1,150,1], index: 1, kind: output, shape index: {}]
  %s2 = sld [smem:[#allocation0]]
  $region37: #{tpu_custom_call.1} parent=0
    _
  %s4 = ssub.s32 1, %s2
  %s5 = scalar_select 0, %s4, %s2
  loop: start=0, step=1, limit=4
  $region2: #{tpu_custom_call.1} parent=0 // loop_pre_header
    _
  $region3: #{tpu_custom_call.1} parent=0 // loop_header
    %s7 = sphi 0, %s11
    %p8 = scmp.ge.s32.totalorder %s7, 4
    %s14 = sphi 0, %s26
    %s15 = sphi 0, %s22
    %s16 = sphi 0, %s14
    %s17 = sphi 0, %s15
    %s18 = sphi 0, %s16
    %s19 = sphi 0, %s17
    %s31 = sphi 0, %s33
    %s34 = sphi 0, %s31
    %s35 = sphi 0, %s34
    %s51 = sphi 0, %s35
    %s59 = sphi 0, %s61
    %s62 = sphi 0, %s59
    %s63 = sphi 0, %s62
    %s79 = sphi 0, %s63
  $region4: #{tpu_custom_call.1} parent=0 // loop_header_branch
    %10 = sbr.rel (%p8) target = $region8
  $region5: #{tpu_custom_call.1} parent=0 // loop_body
    %s12 = ssub.s32 %s7, 1
    %s13 = ssub.s32 %s7, 2
    %s20 = sadd.s32 1, %s15
    %p21 = scmp.ge.s32.totalorder %s20, 1
    %s22 = scalar_select %p21, 0, %s20
    %s23 = sadd.s32 1, %s14
    %s24 = scalar_select %p21, %s23, %s14
    %p25 = scmp.ge.s32.totalorder %s24, 2
    %s26 = scalar_select %p25, 0, %s24
    %s27 = ssub.s32 %s14, %s26
    %s28 = ssub.s32 %s15, %s22
    %s29 = sor.u32 %s27, %s28
    %p30 = scmp.eq.s32.totalorder %s29, 0
    %s32 = sadd.s32 %s31, 1
    %s33 = scalar_select %p30, %s31, %s32
    %p36 = pneg %p30
    %p37 = scmp.eq.s32.totalorder %s7, 1
    %p38 = por %p36, %p37
    %p39 = scmp.ne.s32.totalorder %s31, %s34
    %p40 = scmp.eq.s32.totalorder %s7, 0
    %p41 = por %p39, %p40
    %p42 = scmp.ne.s32.totalorder %s31, %s34
    %p43 = scmp.eq.s32.totalorder %s12, 1
    %p44 = por %p42, %p43
    %p45 = scmp.ne.s32.totalorder %s34, %s35
    %p46 = scmp.eq.s32.totalorder %s12, 0
    %p47 = por %p45, %p46
    %p48 = scmp.ne.s32.totalorder %s34, %s35
    %p49 = scmp.eq.s32.totalorder %s13, 1
    %p50 = por %p48, %p49
    %p52 = scmp.ne.s32.totalorder %s35, %s51
    %p53 = scmp.eq.s32.totalorder %s13, 0
    %p54 = por %p52, %p53
    %s55 = ssub.s32 %s14, %s26
    %s56 = ssub.s32 %s15, %s22
    %s57 = sor.u32 %s55, %s56
    %p58 = scmp.eq.s32.totalorder %s57, 0
    %s60 = sadd.s32 %s59, 1
    %s61 = scalar_select %p58, %s59, %s60
    %p64 = pneg %p58
    %p65 = scmp.eq.s32.totalorder %s7, 1
    %p66 = por %p64, %p65
    %p67 = scmp.ne.s32.totalorder %s59, %s62
    %p68 = scmp.eq.s32.totalorder %s7, 0
    %p69 = por %p67, %p68
    %p70 = scmp.ne.s32.totalorder %s59, %s62
    %p71 = scmp.eq.s32.totalorder %s12, 1
    %p72 = por %p70, %p71
    %p73 = scmp.ne.s32.totalorder %s62, %s63
    %p74 = scmp.eq.s32.totalorder %s12, 0
    %p75 = por %p73, %p74
    %p76 = scmp.ne.s32.totalorder %s62, %s63
    %p77 = scmp.eq.s32.totalorder %s13, 1
    %p78 = por %p76, %p77
    %p80 = scmp.ne.s32.totalorder %s63, %s79
    %p81 = scmp.eq.s32.totalorder %s13, 0
    %p82 = por %p80, %p81
    %p83 = scmp.le.s32.totalorder 1, %s7
    %p84 = scmp.lt.s32.totalorder %s7, 3
    %p85 = pnand %p83, %p84
    %p86 = pneg %p85
    // Predicated region
    $region9: #{tpu_custom_call.1} parent=5 // pred_check
      _
    $region10: #{tpu_custom_call.1} parent=5 // pred_check_branch
      %88 = sbr.rel (%p85) target = $region12
    $region11: #{tpu_custom_call.1} parent=5 // pred_region
      %s89 = ssub.s32 %s7, 1
    $region12: #{tpu_custom_call.1} parent=5 // pred_fallthru
      _
    %p90 = scmp.lt.s32.totalorder %s7, 2
    // Predicated region
    $region13: #{tpu_custom_call.1} parent=5 // pred_check
      %p91 = pneg %p90
    $region14: #{tpu_custom_call.1} parent=5 // pred_check_branch
      %93 = sbr.rel (%p91) target = $region16
    $region15: #{tpu_custom_call.1} parent=5 // pred_region
      // Predicated region
      $region17: #{tpu_custom_call.1} parent=15 // pred_check
        %p94 = pneg %p41
      $region18: #{tpu_custom_call.1} parent=15 // pred_check_branch
        %96 = sbr.rel (%p94) target = $region20
      $region19: #{tpu_custom_call.1} parent=15 // pred_region
        %p97 = scmp.lt.s32.totalorder %s14, 1
        %s98 = scalar_select %p97, %s14, 1
        %p99 = scmp.lt.s32.totalorder %s15, 0
        %s100 = scalar_select %p99, %s15, 0
        %s101 = smul.addr %s98, 19
        %s102 = sadd.s32 %s100, %s101
        %s103 = smul.addr %s102, 8
        %s104 = scalar_lea.vmem %s0, %s103
      $region20: #{tpu_custom_call.1} parent=15 // pred_fallthru
        _
    $region16: #{tpu_custom_call.1} parent=5 // pred_fallthru
      _
    %p105 = scmp.le.s32.totalorder 1, %s7
    %p106 = scmp.lt.s32.totalorder %s7, 3
    %p107 = pnand %p105, %p106
    %p108 = pneg %p107
    // Predicated region
    $region21: #{tpu_custom_call.1} parent=5 // pred_check
      _
    $region22: #{tpu_custom_call.1} parent=5 // pred_check_branch
      %110 = sbr.rel (%p107) target = $region24
    $region23: #{tpu_custom_call.1} parent=5 // pred_region
      %s111 = ssub.s32 %s7, 1
      %p112 = scmp.lt.s32.totalorder %s16, 1
      %s113 = scalar_select %p112, %s16, 1
      %p114 = scmp.lt.s32.totalorder %s17, 0
      %s115 = scalar_select %p114, %s17, 0
      %s116 = smul.addr %s113, 19
      %s117 = sadd.s32 %s115, %s116
      %s118 = smul.addr %s117, 8
      %s119 = scalar_lea.vmem %s0, %s118
      %p120 = pneg %p47
      %p121 = pneg %p44
      %p122 = pneg %p75
      %p123 = pneg %p72
      %p124 = scmp.lt.s32.totalorder %s16, 1
      %s125 = scalar_select %p124, %s16, 1
      %p126 = scmp.lt.s32.totalorder %s17, 0
      %s127 = scalar_select %p126, %s17, 0
      %s128 = smul.addr %s127, 19
      %s129 = smul.addr %s125, 19
      %s130 = sadd.s32 %s128, %s129
      %s131 = smul.addr %s130, 8
      %s132 = scalar_lea.vmem %s1, %s131
      %p133 = scmp.lt.s32.totalorder %s16, 1
      %s134 = scalar_select %p133, %s16, 1
      %p135 = scmp.lt.s32.totalorder %s17, 0
      %s136 = scalar_select %p135, %s17, 0
      %s137 = smul.addr %s134, 19
      %s138 = sadd.s32 %s136, %s137
      %s139 = smul.addr %s138, 8
      %s140 = scalar_lea.vmem %s0, %s139
      %p141 = scmp.lt.s32.totalorder %s16, 1
      %s142 = scalar_select %p141, %s16, 1
      %p143 = scmp.lt.s32.totalorder %s17, 0
      %s144 = scalar_select %p143, %s17, 0
      %s145 = smul.addr %s144, 19
      %s146 = smul.addr %s142, 19
      %s147 = sadd.s32 %s145, %s146
      %s148 = smul.addr %s147, 8
      %s149 = scalar_lea.vmem %s1, %s148
      %v150 = vld [vmem:[%s140] sm:$0xff]
      %v151 = vld [vmem:[%s140 + $0x8] sm:$0xff]
      %v152 = vld [vmem:[%s140 + $0x10] sm:$0xff]
      %v153 = vld [vmem:[%s140 + $0x18] sm:$0xff]
      %v154 = vld [vmem:[%s140 + $0x20] sm:$0xff]
      %v155 = vld [vmem:[%s140 + $0x28] sm:$0xff]
      %v156 = vld [vmem:[%s140 + $0x30] sm:$0xff]
      %v157 = vld [vmem:[%s140 + $0x38] sm:$0xff]
      %v158 = vld [vmem:[%s140 + $0x40] sm:$0xff]
      %v159 = vld [vmem:[%s140 + $0x48] sm:$0xff]
      %v160 = vld [vmem:[%s140 + $0x50] sm:$0xff]
      %v161 = vld [vmem:[%s140 + $0x58] sm:$0xff]
      %v162 = vld [vmem:[%s140 + $0x60] sm:$0xff]
      %v163 = vld [vmem:[%s140 + $0x68] sm:$0xff]
      %v164 = vld [vmem:[%s140 + $0x70] sm:$0xff]
      %v165 = vld [vmem:[%s140 + $0x78] sm:$0xff]
      %v166 = vld [vmem:[%s140 + $0x80] sm:$0xff]
      %v167 = vld [vmem:[%s140 + $0x88] sm:$0xff]
      %v168 = vld [vmem:[%s140 + $0x90] sm:$0x3f]
      %vm169 = vcmask 523264
      %v170 = vsel %vm169, %v150, -inf
      %v171 = vsel %vm169, %v151, -inf
      %v172 = vsel %vm169, %v152, -inf
      %v173 = vsel %vm169, %v153, -inf
      %v174 = vsel %vm169, %v154, -inf
      %v175 = vmax.f32 %v170, %v174
      %v176 = vsel %vm169, %v155, -inf
      %v177 = vmax.f32 %v171, %v176
      %v178 = vsel %vm169, %v156, -inf
      %v179 = vmax.f32 %v172, %v178
      %v180 = vsel %vm169, %v157, -inf
      %v181 = vmax.f32 %v173, %v180
      %v182 = vsel %vm169, %v158, -inf
      %v183 = vmax.f32 %v175, %v182
      %v184 = vsel %vm169, %v159, -inf
      %v185 = vmax.f32 %v177, %v184
      %v186 = vsel %vm169, %v160, -inf
      %v187 = vmax.f32 %v179, %v186
      %v188 = vsel %vm169, %v161, -inf
      %v189 = vmax.f32 %v181, %v188
      %v190 = vsel %vm169, %v162, -inf
      %v191 = vmax.f32 %v183, %v190
      %v192 = vsel %vm169, %v163, -inf
      %v193 = vmax.f32 %v185, %v192
      %v194 = vsel %vm169, %v164, -inf
      %v195 = vmax.f32 %v187, %v194
      %v196 = vsel %vm169, %v165, -inf
      %v197 = vmax.f32 %v189, %v196
      %v198 = vsel %vm169, %v166, -inf
      %v199 = vmax.f32 %v191, %v198
      %v200 = vsel %vm169, %v167, -inf
      %v201 = vmax.f32 %v193, %v200
      %vm202 = vcmask 521216
      %v203 = vsel %vm202, %v168, -inf
      %v204 = vmax.f32 %v195, %v203
      %v205 = vmax.f32 %v199, %v201
      %v206 = vmax.f32 %v204, %v197
      %v207 = vmax.f32 %v205, %v206
      %v208 = vrot.slane %v207, 4
      %v209 = vmax.f32 %v207, %v208
      %v210 = vrot.slane %v209, 2
      %v211 = vmax.f32 %v209, %v210
      %v212 = vrot.slane %v211, 1
      %v213 = vmax.f32 %v211, %v212
      %v214 = vsub.f32 %v150, %v213
      %v215 = vsub.f32 %v151, %v213
      %v216 = vsub.f32 %v152, %v213
      %v217 = vsub.f32 %v153, %v213
      %v218 = vsub.f32 %v154, %v213
      %v219 = vsub.f32 %v155, %v213
      %v220 = vsub.f32 %v156, %v213
      %v221 = vsub.f32 %v157, %v213
      %v222 = vsub.f32 %v158, %v213
      %v223 = vsub.f32 %v159, %v213
      %v224 = vsub.f32 %v160, %v213
      %v225 = vsub.f32 %v161, %v213
      %v226 = vsub.f32 %v162, %v213
      %v227 = vsub.f32 %v163, %v213
      %v228 = vsub.f32 %v164, %v213
      %v229 = vsub.f32 %v165, %v213
      %v230 = vsub.f32 %v166, %v213
      %v231 = vsub.f32 %v167, %v213
      %v232 = vsub.f32 %v168, %v213
      %v233 = vmul.f32 %v214, 1.442695
      %v234 = vpow.pop %v233
      %v235 = vmul.f32 %v215, 1.442695
      %v236 = vpow.pop %v235
      %v237 = vmul.f32 %v216, 1.442695
      %v238 = vpow.pop %v237
      %v239 = vmul.f32 %v217, 1.442695
      %v240 = vpow.pop %v239
      %v241 = vmul.f32 %v218, 1.442695
      %v242 = vpow.pop %v241
      %v243 = vmul.f32 %v219, 1.442695
      %v244 = vpow.pop %v243
      %v245 = vmul.f32 %v220, 1.442695
      %v246 = vpow.pop %v245
      %v247 = vmul.f32 %v221, 1.442695
      %v248 = vpow.pop %v247
      %v249 = vmul.f32 %v222, 1.442695
      %v250 = vpow.pop %v249
      %v251 = vmul.f32 %v223, 1.442695
      %v252 = vpow.pop %v251
      %v253 = vmul.f32 %v224, 1.442695
      %v254 = vpow.pop %v253
      %v255 = vmul.f32 %v225, 1.442695
      %v256 = vpow.pop %v255
      %v257 = vmul.f32 %v226, 1.442695
      %v258 = vpow.pop %v257
      %v259 = vmul.f32 %v227, 1.442695
      %v260 = vpow.pop %v259
      %v261 = vmul.f32 %v228, 1.442695
      %v262 = vpow.pop %v261
      %v263 = vmul.f32 %v229, 1.442695
      %v264 = vpow.pop %v263
      %v265 = vmul.f32 %v230, 1.442695
      %v266 = vpow.pop %v265
      %v267 = vmul.f32 %v231, 1.442695
      %v268 = vpow.pop %v267
      %v269 = vmul.f32 %v232, 1.442695
      %v270 = vpow.pop %v269
      %v271 = vsel %vm169, %v234, 0.0
      %v272 = vsel %vm169, %v236, 0.0
      %v273 = vadd.f32 %v271, %v272
      %v274 = vsel %vm169, %v238, 0.0
      %v275 = vadd.f32 %v273, %v274
      %v276 = vsel %vm169, %v240, 0.0
      %v277 = vadd.f32 %v275, %v276
      %v278 = vsel %vm169, %v242, 0.0
      %v279 = vadd.f32 %v277, %v278
      %v280 = vsel %vm169, %v244, 0.0
      %v281 = vadd.f32 %v279, %v280
      %v282 = vsel %vm169, %v246, 0.0
      %v283 = vadd.f32 %v281, %v282
      %v284 = vsel %vm169, %v248, 0.0
      %v285 = vadd.f32 %v283, %v284
      %v286 = vsel %vm169, %v250, 0.0
      %v287 = vadd.f32 %v285, %v286
      %v288 = vsel %vm169, %v252, 0.0
      %v289 = vadd.f32 %v287, %v288
      %v290 = vsel %vm169, %v254, 0.0
      %v291 = vadd.f32 %v289, %v290
      %v292 = vsel %vm169, %v256, 0.0
      %v293 = vadd.f32 %v291, %v292
      %v294 = vsel %vm169, %v258, 0.0
      %v295 = vadd.f32 %v293, %v294
      %v296 = vsel %vm169, %v260, 0.0
      %v297 = vadd.f32 %v295, %v296
      %v298 = vsel %vm169, %v262, 0.0
      %v299 = vadd.f32 %v297, %v298
      %v300 = vsel %vm169, %v264, 0.0
      %v301 = vadd.f32 %v299, %v300
      %v302 = vsel %vm169, %v266, 0.0
      %v303 = vadd.f32 %v301, %v302
      %v304 = vsel %vm169, %v268, 0.0
      %v305 = vadd.f32 %v303, %v304
      %v306 = vsel %vm202, %v270, 0.0
      %v307 = vadd.f32 %v305, %v306
      %v308 = vrot.slane %v307, 4
      %v309 = vadd.f32 %v307, %v308
      %v310 = vrot.slane %v309, 2
      %v311 = vadd.f32 %v309, %v310
      %v312 = vrot.slane %v311, 1
      %v313 = vadd.f32 %v311, %v312
      %v314 = vrcp.pop %v313
      %v315 = vmul.f32 1.0, %v314
      %v316 = vmul.f32 %v234, %v315
      %v317 = vmul.f32 %v236, %v315
      %v318 = vmul.f32 %v238, %v315
      %v319 = vmul.f32 %v240, %v315
      %v320 = vmul.f32 %v242, %v315
      %v321 = vmul.f32 %v244, %v315
      %v322 = vmul.f32 %v246, %v315
      %v323 = vmul.f32 %v248, %v315
      %v324 = vmul.f32 %v250, %v315
      %v325 = vmul.f32 %v252, %v315
      %v326 = vmul.f32 %v254, %v315
      %v327 = vmul.f32 %v256, %v315
      %v328 = vmul.f32 %v258, %v315
      %v329 = vmul.f32 %v260, %v315
      %v330 = vmul.f32 %v262, %v315
      %v331 = vmul.f32 %v264, %v315
      %v332 = vmul.f32 %v266, %v315
      %v333 = vmul.f32 %v268, %v315
      %v334 = vmul.f32 %v270, %v315
      %v335 = vsel %vm169, %v316, 0.0
      %336 = vadd.xlane.f32.xlu0 %v335
      %v337 = vpop.xlane.xlu0 %336
      %v338 = vsel %vm169, %v317, 0.0
      %339 = vadd.xlane.f32.xlu0 %v338
      %v340 = vpop.xlane.xlu0 %339
      %v341 = vsel %vm169, %v318, 0.0
      %342 = vadd.xlane.f32.xlu0 %v341
      %v343 = vpop.xlane.xlu0 %342
      %v344 = vsel %vm169, %v319, 0.0
      %345 = vadd.xlane.f32.xlu0 %v344
      %v346 = vpop.xlane.xlu0 %345
      %v347 = vsel %vm169, %v320, 0.0
      %348 = vadd.xlane.f32.xlu0 %v347
      %v349 = vpop.xlane.xlu0 %348
      %v350 = vsel %vm169, %v321, 0.0
      %351 = vadd.xlane.f32.xlu0 %v350
      %v352 = vpop.xlane.xlu0 %351
      %v353 = vsel %vm169, %v322, 0.0
      %354 = vadd.xlane.f32.xlu0 %v353
      %v355 = vpop.xlane.xlu0 %354
      %v356 = vsel %vm169, %v323, 0.0
      %357 = vadd.xlane.f32.xlu0 %v356
      %v358 = vpop.xlane.xlu0 %357
      %v359 = vsel %vm169, %v324, 0.0
      %360 = vadd.xlane.f32.xlu0 %v359
      %v361 = vpop.xlane.xlu0 %360
      %v362 = vsel %vm169, %v325, 0.0
      %363 = vadd.xlane.f32.xlu0 %v362
      %v364 = vpop.xlane.xlu0 %363
      %v365 = vsel %vm169, %v326, 0.0
      %366 = vadd.xlane.f32.xlu0 %v365
      %v367 = vpop.xlane.xlu0 %366
      %v368 = vsel %vm169, %v327, 0.0
      %369 = vadd.xlane.f32.xlu0 %v368
      %v370 = vpop.xlane.xlu0 %369
      %v371 = vsel %vm169, %v328, 0.0
      %372 = vadd.xlane.f32.xlu0 %v371
      %v373 = vpop.xlane.xlu0 %372
      %v374 = vsel %vm169, %v329, 0.0
      %375 = vadd.xlane.f32.xlu0 %v374
      %v376 = vpop.xlane.xlu0 %375
      %v377 = vsel %vm169, %v330, 0.0
      %378 = vadd.xlane.f32.xlu0 %v377
      %v379 = vpop.xlane.xlu0 %378
      %v380 = vsel %vm169, %v331, 0.0
      %381 = vadd.xlane.f32.xlu0 %v380
      %v382 = vpop.xlane.xlu0 %381
      %v383 = vsel %vm169, %v332, 0.0
      %384 = vadd.xlane.f32.xlu0 %v383
      %v385 = vpop.xlane.xlu0 %384
      %v386 = vsel %vm169, %v333, 0.0
      %387 = vadd.xlane.f32.xlu0 %v386
      %v388 = vpop.xlane.xlu0 %387
      %v389 = vsel %vm202, %v334, 0.0
      %390 = vadd.xlane.f32.xlu0 %v389
      %v391 = vpop.xlane.xlu0 %390
      %vm392 = vcmask 7168
      %393 = vst.msk [vmem:[%s149] sm:$0xff] %vm392, %v337
      %394 = vst.msk [vmem:[%s149 + $0x8] sm:$0xff] %vm392, %v340
      %395 = vst.msk [vmem:[%s149 + $0x10] sm:$0xff] %vm392, %v343
      %396 = vst.msk [vmem:[%s149 + $0x18] sm:$0xff] %vm392, %v346
      %397 = vst.msk [vmem:[%s149 + $0x20] sm:$0xff] %vm392, %v349
      %398 = vst.msk [vmem:[%s149 + $0x28] sm:$0xff] %vm392, %v352
      %399 = vst.msk [vmem:[%s149 + $0x30] sm:$0xff] %vm392, %v355
      %400 = vst.msk [vmem:[%s149 + $0x38] sm:$0xff] %vm392, %v358
      %401 = vst.msk [vmem:[%s149 + $0x40] sm:$0xff] %vm392, %v361
      %402 = vst.msk [vmem:[%s149 + $0x48] sm:$0xff] %vm392, %v364
      %403 = vst.msk [vmem:[%s149 + $0x50] sm:$0xff] %vm392, %v367
      %404 = vst.msk [vmem:[%s149 + $0x58] sm:$0xff] %vm392, %v370
      %405 = vst.msk [vmem:[%s149 + $0x60] sm:$0xff] %vm392, %v373
      %406 = vst.msk [vmem:[%s149 + $0x68] sm:$0xff] %vm392, %v376
      %407 = vst.msk [vmem:[%s149 + $0x70] sm:$0xff] %vm392, %v379
      %408 = vst.msk [vmem:[%s149 + $0x78] sm:$0xff] %vm392, %v382
      %409 = vst.msk [vmem:[%s149 + $0x80] sm:$0xff] %vm392, %v385
      %410 = vst.msk [vmem:[%s149 + $0x88] sm:$0xff] %vm392, %v388
      %vm411 = vcmask 5120
      %412 = vst.msk [vmem:[%s149 + $0x90] sm:$0x3f] %vm411, %v391
      %p413 = scmp.lt.s32.totalorder %s16, 1
      %s414 = scalar_select %p413, %s16, 1
      %p415 = scmp.lt.s32.totalorder %s17, 0
      %s416 = scalar_select %p415, %s17, 0
      %s417 = smul.addr %s416, 19
      %s418 = smul.addr %s414, 19
      %s419 = sadd.s32 %s417, %s418
      %s420 = smul.addr %s419, 8
      %s421 = scalar_lea.vmem %s1, %s420
      // Predicated region
      $region25: #{tpu_custom_call.1} parent=23 // pred_check
        %p422 = pneg %p72
      $region26: #{tpu_custom_call.1} parent=23 // pred_check_branch
        %424 = sbr.rel (%p422) target = $region28
      $region27: #{tpu_custom_call.1} parent=23 // pred_region
        _
      $region28: #{tpu_custom_call.1} parent=23 // pred_fallthru
        _
    $region24: #{tpu_custom_call.1} parent=5 // pred_fallthru
      _
    %p425 = scmp.le.s32.totalorder 2, %s7
    // Predicated region
    $region29: #{tpu_custom_call.1} parent=5 // pred_check
      %p426 = pneg %p425
    $region30: #{tpu_custom_call.1} parent=5 // pred_check_branch
      %428 = sbr.rel (%p426) target = $region32
    $region31: #{tpu_custom_call.1} parent=5 // pred_region
      %s429 = ssub.s32 %s7, 2
      // Predicated region
      $region33: #{tpu_custom_call.1} parent=31 // pred_check
        %p430 = pneg %p78
      $region34: #{tpu_custom_call.1} parent=31 // pred_check_branch
        %432 = sbr.rel (%p430) target = $region36
      $region35: #{tpu_custom_call.1} parent=31 // pred_region
        %p433 = scmp.lt.s32.totalorder %s18, 1
        %s434 = scalar_select %p433, %s18, 1
        %p435 = scmp.lt.s32.totalorder %s19, 0
        %s436 = scalar_select %p435, %s19, 0
        %s437 = smul.addr %s436, 19
        %s438 = smul.addr %s434, 19
        %s439 = sadd.s32 %s437, %s438
        %s440 = smul.addr %s439, 8
        %s441 = scalar_lea.vmem %s1, %s440
      $region36: #{tpu_custom_call.1} parent=31 // pred_fallthru
        _
    $region32: #{tpu_custom_call.1} parent=5 // pred_fallthru
      _
  $region6: #{tpu_custom_call.1} parent=0 // loop_footer
    %s11 = sadd.s32 1, %s7
  $region7: #{tpu_custom_call.1} parent=0 // loop_footer_branch
    %6 = sbr.rel target = $region3
  $region8: #{tpu_custom_call.1} parent=0 // loop_exit
    _

</llo_original>
